<compile_context>
chip_gen: v6e
topology: v6e:2x2x1
jax: 0.10.0
libtpu: 0.0.40
codegen_flags: <defaults>
</compile_context>

<pallas_src>
import functools

import jax
import jax.numpy as jnp
from jax import lax
from jax.experimental import pallas as pl
from jax.experimental.pallas import tpu as pltpu


def _round_up(x, m):
    return (x + m - 1) // m * m


def _images_per_step(n_batch, hw):
    """How many images to fold into the lane axis of one grid step."""
    try:
        kind = jax.devices()[0].device_kind.lower()
    except Exception:
        kind = ""
    n_tc = 2 if "7" in kind else 1          # v7x: 2 TensorCores/chip; v2-v6: 1
    steps = max(1, min(n_batch, n_tc))      # >=1 step per TensorCore
    ipb = -(-n_batch // steps)              # ceil(n_batch / steps)
    max_ipb = max(1, 2048 // max(hw, 1))    # keep matmul lane width modest (VMEM guard)
    return max(1, min(ipb, max_ipb))


def _make_residual_kernel(H, W, cin, cin_p, cout, cout_p, ipb, neg_slope=0.1):
    HW = H * W
    EXTW = HW + 2 * (W + 1)   # flattened image + (W+1) zero halo on each side

    def conv_bn_lrelu(imgs, w_ref, shift, keep_l, keep_r):
        """imgs: list of ipb (C_p, HW) f32 arrays.  Returns (cout_p, ipb*HW) f32."""
        exts_c, exts_l, exts_r = [], [], []
        for img in imgs:
            cpad = img.shape[0]
            zpad = jnp.zeros((cpad, W + 1), jnp.float32)
            # Zero-extended flattened activation: the W+1 zero lanes on each side
            # provide the top/bottom (and corner) halo of the 3x3 stencil.
            ext = jnp.concatenate([zpad, img, zpad], axis=1)            # (C_p, EXTW)
            exts_c.append(ext)
            # Pre-zero source column W-1 (== masking kx=0 taps at out col 0) and
            # source column 0 (== masking kx=2 taps at out col W-1): 2 selects per
            # layer instead of 6 per-tap multiplies.
            exts_l.append(jnp.where(keep_l, ext, 0.0))
            exts_r.append(jnp.where(keep_r, ext, 0.0))

        taps = []
        for ky in range(3):
            for kx in range(3):
                off = ky * W + kx
                src = exts_l if kx == 0 else (exts_r if kx == 2 else exts_c)
                parts = [e[:, off:off + HW] for e in src]               # static lane-shifted views
                taps.append(parts[0] if len(parts) == 1
                            else jnp.concatenate(parts, axis=1))        # (C_p, ipb*HW)
        # im2col patches; bf16 MXU operands, f32 accumulation.
        patches = jnp.concatenate(taps, axis=0).astype(jnp.bfloat16)    # (9*C_p, ipb*HW)
        acc = jnp.dot(w_ref[...], patches,
                      preferred_element_type=jnp.float32)               # (cout_p, ipb*HW)
        y = acc + shift                                                 # folded BN shift (+ conv bias)
        return jnp.where(y >= 0, y, neg_slope * y)                      # leaky_relu(0.1)

    def kernel(x_ref, w1_ref, w2_ref, shifts_ref, o_ref):
        # Halo / wrap masks generated in-kernel from a lane iota (no HBM input).
        e = lax.broadcasted_iota(jnp.int32, (1, EXTW), 1)
        src_col = (e + (W - 1)) % W          # column of the source pixel at ext lane e
        keep_l = src_col != (W - 1)          # used for kx=0 taps
        keep_r = src_col != 0                # used for kx=2 taps

        shifts = shifts_ref[...]
        shift1 = shifts[:, 0:1]
        shift2 = shifts[:, 1:2]

        # In-kernel cast + channel zero-extension to a sublane multiple.
        imgs1 = []
        for j in range(ipb):
            img = x_ref[j].astype(jnp.float32)                          # (cin, HW)
            if cin_p > cin:
                img = jnp.concatenate(
                    [img, jnp.zeros((cin_p - cin, HW), jnp.float32)], axis=0)
            imgs1.append(img)

        h = conv_bn_lrelu(imgs1, w1_ref, shift1, keep_l, keep_r)        # (cout_p, ipb*HW)
        imgs2 = [h[:, j * HW:(j + 1) * HW] for j in range(ipb)]         # aligned lane slices
        y = conv_bn_lrelu(imgs2, w2_ref, shift2, keep_l, keep_r)        # (cout_p, ipb*HW)

        for j in range(ipb):
            o_ref[j] = y[:cout, j * HW:(j + 1) * HW].astype(o_ref.dtype)  # lane-dense store

    return kernel


def _fold_layer(w, b, gamma, beta, mean, var, cin_p, cout_p, eps=1e-5):
    """Fold conv bias + inference BN into the weights (scale) and a shift vector.
    Weights are flattened/zero-padded to (cout_p, 9*cin_p) im2col tap order, bf16."""
    cout, cin = w.shape[0], w.shape[1]
    scale = gamma / jnp.sqrt(var + eps)                                 # (Cout,)
    shift = beta + (b - mean) * scale                                   # conv bias folded in
    w = w * scale[:, None, None, None]                                  # fold BN scale into weights
    w = jnp.pad(w, ((0, cout_p - cout), (0, cin_p - cin), (0, 0), (0, 0)))
    # w[co, ci, ky, kx] -> w_flat[co, (ky*3 + kx)*cin_p + ci]
    w_flat = jnp.transpose(w, (0, 2, 3, 1)).reshape(cout_p, 9 * cin_p).astype(jnp.bfloat16)
    shift = jnp.pad(shift, (0, cout_p - cout)).reshape(cout_p, 1).astype(jnp.float32)
    return w_flat, shift


@functools.partial(jax.jit, static_argnums=(2,))
def _residual_forward_impl(x_nchw, params, ipb):
    N, Cin, H, W = x_nchw.shape
    Cout = params["w1"].shape[0]
    HW = H * W
    cin_p = _round_up(Cin, 8)
    cout_p = _round_up(Cout, 8)

    w1f, t1 = _fold_layer(params["w1"], params["b1"], params["g1"], params["beta1"],
                          params["m1"], params["v1"], cin_p, cout_p)
    w2f, t2 = _fold_layer(params["w2"], params["b2"], params["g2"], params["beta2"],
                          params["m2"], params["v2"], cout_p, cout_p)
    shifts = jnp.concatenate([t1, t2], axis=1)                          # (cout_p, 2)

    # NCHW -> (N, C, H*W): a free reshape.  No wrapper-side cast / channel pad.
    x_flat = x_nchw.reshape(N, Cin, HW)
    n_pad = (-N) % ipb
    if n_pad:
        x_flat = jnp.concatenate(
            [x_flat, jnp.zeros((n_pad, Cin, HW), x_flat.dtype)], axis=0)
    Np = N + n_pad

    kernel = _make_residual_kernel(H, W, Cin, cin_p, Cout, cout_p, ipb)
    out = pl.pallas_call(
        kernel,
        out_shape=jax.ShapeDtypeStruct((Np, Cout, HW), x_nchw.dtype),
        grid_spec=pl.GridSpec(
            grid=(Np // ipb,),
            in_specs=[
                pl.BlockSpec((ipb, Cin, HW), lambda n: (n, 0, 0)),       # x (ipb images / step)
                pl.BlockSpec((cout_p, 9 * cin_p), lambda n: (0, 0)),     # w1 (im2col, BN-scaled, bf16)
                pl.BlockSpec((cout_p, 9 * cout_p), lambda n: (0, 0)),    # w2 (im2col, BN-scaled, bf16)
                pl.BlockSpec((cout_p, 2), lambda n: (0, 0)),             # shifts (both layers)
            ],
            out_specs=pl.BlockSpec((ipb, Cout, HW), lambda n: (n, 0, 0)),
        ),
        compiler_params=pltpu.CompilerParams(
            dimension_semantics=("parallel",)),
    )(x_flat, w1f, w2f, shifts)

    if n_pad:
        out = out[:N]
    return out.reshape(N, Cout, H, W)


def residual_forward(x_nchw, params):
    """Forward pass matching the PyTorch module (NCHW in, NCHW out, eval-mode BN)."""
    N, _, H, W = x_nchw.shape
    ipb = _images_per_step(N, H * W)     # all images in one step on 1-TC chips, 2 steps on v7x
    return _residual_forward_impl(x_nchw, params, ipb)


def make_params(key, channel_in, channel_out):
    """Deterministic synthetic parameters with the PyTorch module's shapes/semantics."""
    ks = jax.random.split(key, 12)

    def conv(kw, kb, cin, cout):
        w = 0.1 * jax.random.normal(kw, (cout, cin, 3, 3), jnp.float32)   # OIHW (PyTorch)
        b = 0.1 * jax.random.normal(kb, (cout,), jnp.float32)
        return w, b

    def bn(kg, kb, km, kv, c):
        gamma = 1.0 + 0.1 * jax.random.normal(kg, (c,), jnp.float32)
        beta = 0.1 * jax.random.normal(kb, (c,), jnp.float32)
        mean = 0.1 * jax.random.normal(km, (c,), jnp.float32)
        var = jnp.abs(jax.random.normal(kv, (c,), jnp.float32)) + 0.5
        return gamma, beta, mean, var

    w1, b1 = conv(ks[0], ks[1], channel_in, channel_out)
    g1, beta1, m1, v1 = bn(ks[2], ks[3], ks[4], ks[5], channel_out)
    w2, b2 = conv(ks[6], ks[7], channel_out, channel_out)
    g2, beta2, m2, v2 = bn(ks[8], ks[9], ks[10], ks[11], channel_out)
    return dict(w1=w1, b1=b1, g1=g1, beta1=beta1, m1=m1, v1=v1,
                w2=w2, b2=b2, g2=g2, beta2=beta2, m2=m2, v2=v2)


def _reference_forward(x_nchw, params, eps=1e-5):
    """Pure-JAX (lax.conv) reference in NCHW with eval-mode BatchNorm."""
    def layer(x, w, b, gamma, beta, mean, var):
        y = lax.conv_general_dilated(
            x, w, window_strides=(1, 1), padding=((1, 1), (1, 1)),
            dimension_numbers=("NCHW", "OIHW", "NCHW"),
            precision=lax.Precision.HIGHEST)
        y = y + b[None, :, None, None]
        inv = (gamma / jnp.sqrt(var + eps))[None, :, None, None]
        y = (y - mean[None, :, None, None]) * inv + beta[None, :, None, None]
        return jnp.where(y >= 0, y, 0.1 * y)

    x = layer(x_nchw, params["w1"], params["b1"], params["g1"], params["beta1"],
              params["m1"], params["v1"])
    x = layer(x, params["w2"], params["b2"], params["g2"], params["beta2"],
              params["m2"], params["v2"])
    return x


if __name__ == "__main__":
    key = jax.random.PRNGKey(0)
    k_x, k_p = jax.random.split(key)

    N, C_in, C_out, H, W = 2, 4, 8, 16, 16
    x = jax.random.normal(k_x, (N, C_in, H, W), jnp.float32)   # NCHW, like PyTorch
    params = make_params(k_p, C_in, C_out)

    out = jax.block_until_ready(residual_forward(x, params))

    ref = _reference_forward(x, params)
    assert out.shape == (N, C_out, H, W), out.shape
    err = float(jnp.max(jnp.abs(out - ref)))
    # Tolerance accounts for single-pass bf16 MXU operands vs. the HIGHEST-precision
    # f32 reference (stencil/BN/mask logic is exact; only dot precision differs).
    assert jnp.allclose(out, ref, atol=3e-2, rtol=3e-2), f"mismatch vs reference, max abs err={err}"

    print("KERNEL_OK")
</pallas_src>

<mosaic_0001>
module attributes {stable_mosaic.version = 11 : i64} {
  func.func @kernel(%arg0: i32, %arg1: memref<2x4x256xf32, #tpu.memory_space<vmem>>, %arg2: memref<8x72xbf16, #tpu.memory_space<vmem>>, %arg3: memref<8x72xbf16, #tpu.memory_space<vmem>>, %arg4: memref<8x2xf32, #tpu.memory_space<vmem>>, %arg5: memref<2x8x256xf32, #tpu.memory_space<vmem>>) attributes {dimension_semantics = [#tpu.dimension_semantics<parallel>], iteration_bounds = array<i64: 1>, scalar_prefetch = 0 : i64, scratch_operands = 0 : i64, tpu.core_type = #tpu.core_type<tc>, window_params = [{transform_indices = @transform_0, window_bounds = array<i64: 2, 4, 256>}, {pipeline_mode = #tpu.pipeline_mode<synchronous>, transform_indices = @transform_1, window_bounds = array<i64: 8, 72>}, {pipeline_mode = #tpu.pipeline_mode<synchronous>, transform_indices = @transform_2, window_bounds = array<i64: 8, 72>}, {pipeline_mode = #tpu.pipeline_mode<synchronous>, transform_indices = @transform_3, window_bounds = array<i64: 8, 2>}, {transform_indices = @transform_4, window_bounds = array<i64: 2, 8, 256>}]} {
    %0 = tpu.iota {dimensions = array<i32: 1>} : vector<1x290xi32>
    %c15_i32 = arith.constant 15 : i32
    %1 = vector.broadcast %c15_i32 : i32 to vector<1x290xi32>
    %2 = arith.addi %0, %1 : vector<1x290xi32>
    %c16_i32 = arith.constant 16 : i32
    %c0_i32 = arith.constant 0 : i32
    %3 = arith.cmpi eq, %c16_i32, %c0_i32 : i32
    %c1_i32 = arith.constant 1 : i32
    %4 = arith.select %3, %c1_i32, %c16_i32 : i32
    %5 = vector.broadcast %4 : i32 to vector<1x290xi32>
    %6 = arith.remsi %2, %5 : vector<1x290xi32>
    %c0_i32_0 = arith.constant 0 : i32
    %7 = vector.broadcast %c0_i32_0 : i32 to vector<1x290xi32>
    %8 = arith.cmpi ne, %6, %7 : vector<1x290xi32>
    %c0_i32_1 = arith.constant 0 : i32
    %9 = vector.broadcast %c0_i32_1 : i32 to vector<1x290xi32>
    %10 = arith.cmpi slt, %6, %9 : vector<1x290xi32>
    %c0_i32_2 = arith.constant 0 : i32
    %11 = arith.cmpi slt, %4, %c0_i32_2 : i32
    %12 = vector.broadcast %11 : i1 to vector<1x290xi1>
    %13 = vector.broadcast %12 : vector<1x290xi1> to vector<1x290xi1>
    %14 = arith.xori %10, %13 : vector<1x290xi1>
    %15 = arith.andi %14, %8 : vector<1x290xi1>
    %16 = vector.broadcast %4 : i32 to vector<1x290xi32>
    %17 = arith.addi %6, %16 : vector<1x290xi32>
    %18 = arith.select %15, %17, %6 : vector<1x290xi1>, vector<1x290xi32>
    %c15_i32_3 = arith.constant 15 : i32
    %19 = vector.broadcast %c15_i32_3 : i32 to vector<1x290xi32>
    %20 = arith.cmpi ne, %18, %19 : vector<1x290xi32>
    %c0_i32_4 = arith.constant 0 : i32
    %21 = vector.broadcast %c0_i32_4 : i32 to vector<1x290xi32>
    %22 = arith.cmpi ne, %18, %21 : vector<1x290xi32>
    %c0 = arith.constant 0 : index
    %c0_5 = arith.constant 0 : index
    %23 = vector.load %arg4[%c0, %c0_5] : memref<8x2xf32, #tpu.memory_space<vmem>>, vector<8x2xf32>
    %24 = vector.extract_strided_slice %23 {offsets = [0, 0], sizes = [8, 1], strides = [1, 1]} : vector<8x2xf32> to vector<8x1xf32>
    %25 = vector.extract_strided_slice %23 {offsets = [0, 1], sizes = [8, 1], strides = [1, 1]} : vector<8x2xf32> to vector<8x1xf32>
    %c0_6 = arith.constant 0 : index
    %c0_7 = arith.constant 0 : index
    %c0_8 = arith.constant 0 : index
    %26 = vector.load %arg1[%c0_6, %c0_7, %c0_8] : memref<2x4x256xf32, #tpu.memory_space<vmem>>, vector<1x4x256xf32>
    %27 = vector.shape_cast %26 : vector<1x4x256xf32> to vector<4x256xf32>
    %cst = arith.constant 0.000000e+00 : f32
    %28 = vector.broadcast %cst : f32 to vector<4x256xf32>
    %29 = tpu.concatenate %27, %28 in 0 : vector<4x256xf32>, vector<4x256xf32> -> vector<8x256xf32>
    %c1 = arith.constant 1 : index
    %c0_9 = arith.constant 0 : index
    %c0_10 = arith.constant 0 : index
    %30 = vector.load %arg1[%c1, %c0_9, %c0_10] : memref<2x4x256xf32, #tpu.memory_space<vmem>>, vector<1x4x256xf32>
    %31 = vector.shape_cast %30 : vector<1x4x256xf32> to vector<4x256xf32>
    %cst_11 = arith.constant 0.000000e+00 : f32
    %32 = vector.broadcast %cst_11 : f32 to vector<4x256xf32>
    %33 = tpu.concatenate %31, %32 in 0 : vector<4x256xf32>, vector<4x256xf32> -> vector<8x256xf32>
    %cst_12 = arith.constant 0.000000e+00 : f32
    %34 = vector.broadcast %cst_12 : f32 to vector<8x17xf32>
    %35 = tpu.concatenate %34, %29, %34 in 1 : vector<8x17xf32>, vector<8x256xf32>, vector<8x17xf32> -> vector<8x290xf32>
    %cst_13 = arith.constant 0.000000e+00 : f32
    %36 = vector.shape_cast %20 : vector<1x290xi1> to vector<1x290xi1>
    %37 = vector.broadcast %36 : vector<1x290xi1> to vector<8x290xi1>
    %38 = vector.broadcast %cst_13 : f32 to vector<8x290xf32>
    %39 = arith.select %37, %35, %38 : vector<8x290xi1>, vector<8x290xf32>
    %cst_14 = arith.constant 0.000000e+00 : f32
    %40 = vector.shape_cast %22 : vector<1x290xi1> to vector<1x290xi1>
    %41 = vector.broadcast %40 : vector<1x290xi1> to vector<8x290xi1>
    %42 = vector.broadcast %cst_14 : f32 to vector<8x290xf32>
    %43 = arith.select %41, %35, %42 : vector<8x290xi1>, vector<8x290xf32>
    %cst_15 = arith.constant 0.000000e+00 : f32
    %44 = vector.broadcast %cst_15 : f32 to vector<8x17xf32>
    %45 = tpu.concatenate %44, %33, %44 in 1 : vector<8x17xf32>, vector<8x256xf32>, vector<8x17xf32> -> vector<8x290xf32>
    %cst_16 = arith.constant 0.000000e+00 : f32
    %46 = vector.shape_cast %20 : vector<1x290xi1> to vector<1x290xi1>
    %47 = vector.broadcast %46 : vector<1x290xi1> to vector<8x290xi1>
    %48 = vector.broadcast %cst_16 : f32 to vector<8x290xf32>
    %49 = arith.select %47, %45, %48 : vector<8x290xi1>, vector<8x290xf32>
    %cst_17 = arith.constant 0.000000e+00 : f32
    %50 = vector.shape_cast %22 : vector<1x290xi1> to vector<1x290xi1>
    %51 = vector.broadcast %50 : vector<1x290xi1> to vector<8x290xi1>
    %52 = vector.broadcast %cst_17 : f32 to vector<8x290xf32>
    %53 = arith.select %51, %45, %52 : vector<8x290xi1>, vector<8x290xf32>
    %54 = vector.extract_strided_slice %39 {offsets = [0, 0], sizes = [8, 256], strides = [1, 1]} : vector<8x290xf32> to vector<8x256xf32>
    %55 = vector.extract_strided_slice %49 {offsets = [0, 0], sizes = [8, 256], strides = [1, 1]} : vector<8x290xf32> to vector<8x256xf32>
    %56 = tpu.concatenate %54, %55 in 1 : vector<8x256xf32>, vector<8x256xf32> -> vector<8x512xf32>
    %57 = vector.extract_strided_slice %35 {offsets = [0, 1], sizes = [8, 256], strides = [1, 1]} : vector<8x290xf32> to vector<8x256xf32>
    %58 = vector.extract_strided_slice %45 {offsets = [0, 1], sizes = [8, 256], strides = [1, 1]} : vector<8x290xf32> to vector<8x256xf32>
    %59 = tpu.concatenate %57, %58 in 1 : vector<8x256xf32>, vector<8x256xf32> -> vector<8x512xf32>
    %60 = vector.extract_strided_slice %43 {offsets = [0, 2], sizes = [8, 256], strides = [1, 1]} : vector<8x290xf32> to vector<8x256xf32>
    %61 = vector.extract_strided_slice %53 {offsets = [0, 2], sizes = [8, 256], strides = [1, 1]} : vector<8x290xf32> to vector<8x256xf32>
    %62 = tpu.concatenate %60, %61 in 1 : vector<8x256xf32>, vector<8x256xf32> -> vector<8x512xf32>
    %63 = vector.extract_strided_slice %39 {offsets = [0, 16], sizes = [8, 256], strides = [1, 1]} : vector<8x290xf32> to vector<8x256xf32>
    %64 = vector.extract_strided_slice %49 {offsets = [0, 16], sizes = [8, 256], strides = [1, 1]} : vector<8x290xf32> to vector<8x256xf32>
    %65 = tpu.concatenate %63, %64 in 1 : vector<8x256xf32>, vector<8x256xf32> -> vector<8x512xf32>
    %66 = vector.extract_strided_slice %35 {offsets = [0, 17], sizes = [8, 256], strides = [1, 1]} : vector<8x290xf32> to vector<8x256xf32>
    %67 = vector.extract_strided_slice %45 {offsets = [0, 17], sizes = [8, 256], strides = [1, 1]} : vector<8x290xf32> to vector<8x256xf32>
    %68 = tpu.concatenate %66, %67 in 1 : vector<8x256xf32>, vector<8x256xf32> -> vector<8x512xf32>
    %69 = vector.extract_strided_slice %43 {offsets = [0, 18], sizes = [8, 256], strides = [1, 1]} : vector<8x290xf32> to vector<8x256xf32>
    %70 = vector.extract_strided_slice %53 {offsets = [0, 18], sizes = [8, 256], strides = [1, 1]} : vector<8x290xf32> to vector<8x256xf32>
    %71 = tpu.concatenate %69, %70 in 1 : vector<8x256xf32>, vector<8x256xf32> -> vector<8x512xf32>
    %72 = vector.extract_strided_slice %39 {offsets = [0, 32], sizes = [8, 256], strides = [1, 1]} : vector<8x290xf32> to vector<8x256xf32>
    %73 = vector.extract_strided_slice %49 {offsets = [0, 32], sizes = [8, 256], strides = [1, 1]} : vector<8x290xf32> to vector<8x256xf32>
    %74 = tpu.concatenate %72, %73 in 1 : vector<8x256xf32>, vector<8x256xf32> -> vector<8x512xf32>
    %75 = vector.extract_strided_slice %35 {offsets = [0, 33], sizes = [8, 256], strides = [1, 1]} : vector<8x290xf32> to vector<8x256xf32>
    %76 = vector.extract_strided_slice %45 {offsets = [0, 33], sizes = [8, 256], strides = [1, 1]} : vector<8x290xf32> to vector<8x256xf32>
    %77 = tpu.concatenate %75, %76 in 1 : vector<8x256xf32>, vector<8x256xf32> -> vector<8x512xf32>
    %78 = vector.extract_strided_slice %43 {offsets = [0, 34], sizes = [8, 256], strides = [1, 1]} : vector<8x290xf32> to vector<8x256xf32>
    %79 = vector.extract_strided_slice %53 {offsets = [0, 34], sizes = [8, 256], strides = [1, 1]} : vector<8x290xf32> to vector<8x256xf32>
    %80 = tpu.concatenate %78, %79 in 1 : vector<8x256xf32>, vector<8x256xf32> -> vector<8x512xf32>
    %81 = tpu.concatenate %56, %59, %62, %65, %68, %71, %74, %77, %80 in 0 : vector<8x512xf32>, vector<8x512xf32>, vector<8x512xf32>, vector<8x512xf32>, vector<8x512xf32>, vector<8x512xf32>, vector<8x512xf32>, vector<8x512xf32>, vector<8x512xf32> -> vector<72x512xf32>
    %82 = arith.truncf %81 : vector<72x512xf32> to vector<72x512xbf16>
    %c0_18 = arith.constant 0 : index
    %c0_19 = arith.constant 0 : index
    %83 = vector.load %arg2[%c0_18, %c0_19] : memref<8x72xbf16, #tpu.memory_space<vmem>>, vector<8x72xbf16>
    %cst_20 = arith.constant dense<0.000000e+00> : vector<8x512xf32>
    %84 = tpu.matmul %83, %82, %cst_20 {dimension_numbers = #tpu.dot_dimension_numbers<[1], [0], [0], [1], [0, 0, 1, 1], [], []>} : vector<8x72xbf16>, vector<72x512xbf16>, vector<8x512xf32> -> vector<8x512xf32>
    %85 = vector.broadcast %24 : vector<8x1xf32> to vector<8x512xf32>
    %86 = arith.addf %84, %85 : vector<8x512xf32>
    %cst_21 = arith.constant 0.000000e+00 : f32
    %87 = vector.broadcast %cst_21 : f32 to vector<8x512xf32>
    %88 = arith.cmpf oge, %86, %87 : vector<8x512xf32>
    %cst_22 = arith.constant 1.000000e-01 : f32
    %89 = vector.broadcast %cst_22 : f32 to vector<8x512xf32>
    %90 = arith.mulf %89, %86 : vector<8x512xf32>
    %91 = arith.select %88, %86, %90 : vector<8x512xi1>, vector<8x512xf32>
    %92 = vector.extract_strided_slice %91 {offsets = [0, 0], sizes = [8, 256], strides = [1, 1]} : vector<8x512xf32> to vector<8x256xf32>
    %93 = vector.extract_strided_slice %91 {offsets = [0, 256], sizes = [8, 256], strides = [1, 1]} : vector<8x512xf32> to vector<8x256xf32>
    %cst_23 = arith.constant 0.000000e+00 : f32
    %94 = vector.broadcast %cst_23 : f32 to vector<8x17xf32>
    %95 = tpu.concatenate %94, %92, %94 in 1 : vector<8x17xf32>, vector<8x256xf32>, vector<8x17xf32> -> vector<8x290xf32>
    %cst_24 = arith.constant 0.000000e+00 : f32
    %96 = vector.shape_cast %20 : vector<1x290xi1> to vector<1x290xi1>
    %97 = vector.broadcast %96 : vector<1x290xi1> to vector<8x290xi1>
    %98 = vector.broadcast %cst_24 : f32 to vector<8x290xf32>
    %99 = arith.select %97, %95, %98 : vector<8x290xi1>, vector<8x290xf32>
    %cst_25 = arith.constant 0.000000e+00 : f32
    %100 = vector.shape_cast %22 : vector<1x290xi1> to vector<1x290xi1>
    %101 = vector.broadcast %100 : vector<1x290xi1> to vector<8x290xi1>
    %102 = vector.broadcast %cst_25 : f32 to vector<8x290xf32>
    %103 = arith.select %101, %95, %102 : vector<8x290xi1>, vector<8x290xf32>
    %cst_26 = arith.constant 0.000000e+00 : f32
    %104 = vector.broadcast %cst_26 : f32 to vector<8x17xf32>
    %105 = tpu.concatenate %104, %93, %104 in 1 : vector<8x17xf32>, vector<8x256xf32>, vector<8x17xf32> -> vector<8x290xf32>
    %cst_27 = arith.constant 0.000000e+00 : f32
    %106 = vector.shape_cast %20 : vector<1x290xi1> to vector<1x290xi1>
    %107 = vector.broadcast %106 : vector<1x290xi1> to vector<8x290xi1>
    %108 = vector.broadcast %cst_27 : f32 to vector<8x290xf32>
    %109 = arith.select %107, %105, %108 : vector<8x290xi1>, vector<8x290xf32>
    %cst_28 = arith.constant 0.000000e+00 : f32
    %110 = vector.shape_cast %22 : vector<1x290xi1> to vector<1x290xi1>
    %111 = vector.broadcast %110 : vector<1x290xi1> to vector<8x290xi1>
    %112 = vector.broadcast %cst_28 : f32 to vector<8x290xf32>
    %113 = arith.select %111, %105, %112 : vector<8x290xi1>, vector<8x290xf32>
    %114 = vector.extract_strided_slice %99 {offsets = [0, 0], sizes = [8, 256], strides = [1, 1]} : vector<8x290xf32> to vector<8x256xf32>
    %115 = vector.extract_strided_slice %109 {offsets = [0, 0], sizes = [8, 256], strides = [1, 1]} : vector<8x290xf32> to vector<8x256xf32>
    %116 = tpu.concatenate %114, %115 in 1 : vector<8x256xf32>, vector<8x256xf32> -> vector<8x512xf32>
    %117 = vector.extract_strided_slice %95 {offsets = [0, 1], sizes = [8, 256], strides = [1, 1]} : vector<8x290xf32> to vector<8x256xf32>
    %118 = vector.extract_strided_slice %105 {offsets = [0, 1], sizes = [8, 256], strides = [1, 1]} : vector<8x290xf32> to vector<8x256xf32>
    %119 = tpu.concatenate %117, %118 in 1 : vector<8x256xf32>, vector<8x256xf32> -> vector<8x512xf32>
    %120 = vector.extract_strided_slice %103 {offsets = [0, 2], sizes = [8, 256], strides = [1, 1]} : vector<8x290xf32> to vector<8x256xf32>
    %121 = vector.extract_strided_slice %113 {offsets = [0, 2], sizes = [8, 256], strides = [1, 1]} : vector<8x290xf32> to vector<8x256xf32>
    %122 = tpu.concatenate %120, %121 in 1 : vector<8x256xf32>, vector<8x256xf32> -> vector<8x512xf32>
    %123 = vector.extract_strided_slice %99 {offsets = [0, 16], sizes = [8, 256], strides = [1, 1]} : vector<8x290xf32> to vector<8x256xf32>
    %124 = vector.extract_strided_slice %109 {offsets = [0, 16], sizes = [8, 256], strides = [1, 1]} : vector<8x290xf32> to vector<8x256xf32>
    %125 = tpu.concatenate %123, %124 in 1 : vector<8x256xf32>, vector<8x256xf32> -> vector<8x512xf32>
    %126 = vector.extract_strided_slice %95 {offsets = [0, 17], sizes = [8, 256], strides = [1, 1]} : vector<8x290xf32> to vector<8x256xf32>
    %127 = vector.extract_strided_slice %105 {offsets = [0, 17], sizes = [8, 256], strides = [1, 1]} : vector<8x290xf32> to vector<8x256xf32>
    %128 = tpu.concatenate %126, %127 in 1 : vector<8x256xf32>, vector<8x256xf32> -> vector<8x512xf32>
    %129 = vector.extract_strided_slice %103 {offsets = [0, 18], sizes = [8, 256], strides = [1, 1]} : vector<8x290xf32> to vector<8x256xf32>
    %130 = vector.extract_strided_slice %113 {offsets = [0, 18], sizes = [8, 256], strides = [1, 1]} : vector<8x290xf32> to vector<8x256xf32>
    %131 = tpu.concatenate %129, %130 in 1 : vector<8x256xf32>, vector<8x256xf32> -> vector<8x512xf32>
    %132 = vector.extract_strided_slice %99 {offsets = [0, 32], sizes = [8, 256], strides = [1, 1]} : vector<8x290xf32> to vector<8x256xf32>
    %133 = vector.extract_strided_slice %109 {offsets = [0, 32], sizes = [8, 256], strides = [1, 1]} : vector<8x290xf32> to vector<8x256xf32>
    %134 = tpu.concatenate %132, %133 in 1 : vector<8x256xf32>, vector<8x256xf32> -> vector<8x512xf32>
    %135 = vector.extract_strided_slice %95 {offsets = [0, 33], sizes = [8, 256], strides = [1, 1]} : vector<8x290xf32> to vector<8x256xf32>
    %136 = vector.extract_strided_slice %105 {offsets = [0, 33], sizes = [8, 256], strides = [1, 1]} : vector<8x290xf32> to vector<8x256xf32>
    %137 = tpu.concatenate %135, %136 in 1 : vector<8x256xf32>, vector<8x256xf32> -> vector<8x512xf32>
    %138 = vector.extract_strided_slice %103 {offsets = [0, 34], sizes = [8, 256], strides = [1, 1]} : vector<8x290xf32> to vector<8x256xf32>
    %139 = vector.extract_strided_slice %113 {offsets = [0, 34], sizes = [8, 256], strides = [1, 1]} : vector<8x290xf32> to vector<8x256xf32>
    %140 = tpu.concatenate %138, %139 in 1 : vector<8x256xf32>, vector<8x256xf32> -> vector<8x512xf32>
    %141 = tpu.concatenate %116, %119, %122, %125, %128, %131, %134, %137, %140 in 0 : vector<8x512xf32>, vector<8x512xf32>, vector<8x512xf32>, vector<8x512xf32>, vector<8x512xf32>, vector<8x512xf32>, vector<8x512xf32>, vector<8x512xf32>, vector<8x512xf32> -> vector<72x512xf32>
    %142 = arith.truncf %141 : vector<72x512xf32> to vector<72x512xbf16>
    %c0_29 = arith.constant 0 : index
    %c0_30 = arith.constant 0 : index
    %143 = vector.load %arg3[%c0_29, %c0_30] : memref<8x72xbf16, #tpu.memory_space<vmem>>, vector<8x72xbf16>
    %cst_31 = arith.constant dense<0.000000e+00> : vector<8x512xf32>
    %144 = tpu.matmul %143, %142, %cst_31 {dimension_numbers = #tpu.dot_dimension_numbers<[1], [0], [0], [1], [0, 0, 1, 1], [], []>} : vector<8x72xbf16>, vector<72x512xbf16>, vector<8x512xf32> -> vector<8x512xf32>
    %145 = vector.broadcast %25 : vector<8x1xf32> to vector<8x512xf32>
    %146 = arith.addf %144, %145 : vector<8x512xf32>
    %cst_32 = arith.constant 0.000000e+00 : f32
    %147 = vector.broadcast %cst_32 : f32 to vector<8x512xf32>
    %148 = arith.cmpf oge, %146, %147 : vector<8x512xf32>
    %cst_33 = arith.constant 1.000000e-01 : f32
    %149 = vector.broadcast %cst_33 : f32 to vector<8x512xf32>
    %150 = arith.mulf %149, %146 : vector<8x512xf32>
    %151 = arith.select %148, %146, %150 : vector<8x512xi1>, vector<8x512xf32>
    %152 = vector.extract_strided_slice %151 {offsets = [0, 0], sizes = [8, 256], strides = [1, 1]} : vector<8x512xf32> to vector<8x256xf32>
    %c0_34 = arith.constant 0 : index
    %c0_35 = arith.constant 0 : index
    %c0_36 = arith.constant 0 : index
    %153 = vector.load %arg5[%c0_34, %c0_35, %c0_36] : memref<2x8x256xf32, #tpu.memory_space<vmem>>, vector<1x8x256xf32>
    %154 = vector.shape_cast %153 : vector<1x8x256xf32> to vector<8x256xf32>
    %155 = vector.shape_cast %152 : vector<8x256xf32> to vector<1x8x256xf32>
    tpu.vector_store %arg5[%c0_34, %c0_35, %c0_36], %155 {strides = array<i32>} : memref<2x8x256xf32, #tpu.memory_space<vmem>>, vector<1x8x256xf32>,
    %156 = vector.extract_strided_slice %151 {offsets = [0, 256], sizes = [8, 256], strides = [1, 1]} : vector<8x512xf32> to vector<8x256xf32>
    %c1_37 = arith.constant 1 : index
    %c0_38 = arith.constant 0 : index
    %c0_39 = arith.constant 0 : index
    %157 = vector.load %arg5[%c1_37, %c0_38, %c0_39] : memref<2x8x256xf32, #tpu.memory_space<vmem>>, vector<1x8x256xf32>
    %158 = vector.shape_cast %157 : vector<1x8x256xf32> to vector<8x256xf32>
    %159 = vector.shape_cast %156 : vector<8x256xf32> to vector<1x8x256xf32>
    tpu.vector_store %arg5[%c1_37, %c0_38, %c0_39], %159 {strides = array<i32>} : memref<2x8x256xf32, #tpu.memory_space<vmem>>, vector<1x8x256xf32>,
    return
  }
  func.func @transform_0(%arg0: i32) -> (i32, i32, i32) {
    %c0_i32 = arith.constant 0 : i32
    %c0_i32_0 = arith.constant 0 : i32
    %c0_i32_1 = arith.constant 0 : i32
    return %arg0, %c0_i32, %c0_i32_0 : i32, i32, i32
  }
  func.func @transform_1(%arg0: i32) -> (i32, i32) {
    %c0_i32 = arith.constant 0 : i32
    %c0_i32_0 = arith.constant 0 : i32
    %c0_i32_1 = arith.constant 0 : i32
    return %c0_i32, %c0_i32_0 : i32, i32
  }
  func.func @transform_2(%arg0: i32) -> (i32, i32) {
    %c0_i32 = arith.constant 0 : i32
    %c0_i32_0 = arith.constant 0 : i32
    %c0_i32_1 = arith.constant 0 : i32
    return %c0_i32, %c0_i32_0 : i32, i32
  }
  func.func @transform_3(%arg0: i32) -> (i32, i32) {
    %c0_i32 = arith.constant 0 : i32
    %c0_i32_0 = arith.constant 0 : i32
    %c0_i32_1 = arith.constant 0 : i32
    return %c0_i32, %c0_i32_0 : i32, i32
  }
  func.func @transform_4(%arg0: i32) -> (i32, i32, i32) {
    %c0_i32 = arith.constant 0 : i32
    %c0_i32_0 = arith.constant 0 : i32
    %c0_i32_1 = arith.constant 0 : i32
    return %arg0, %c0_i32, %c0_i32_0 : i32, i32, i32
  }
}

</mosaic_0001>

<llo_original>
// kernel: _residual_forward_impl.1
$region0: #{_residual_forward_impl.1}
  #allocation0 [shape = 'u32[]', space=smem, size = 0x4, offset = 0x4, fixed_abs, tag = 'smem constant byte address 0x4 - core index']
  #allocation1 [shape = 'u32[144,128]{1,0:T(1,128)}', space=vmem, size = 0x12000, scoped, tag = 'internal scratch']
  %s0 = inlined_call_operand.vmem [shape: f32[2,4,256], index: 0, kind: input, shape index: {}]
  %s1 = inlined_call_operand.vmem [shape: bf16[8,72], index: 1, kind: input, shape index: {}]
  %s2 = inlined_call_operand.vmem [shape: bf16[8,72], index: 2, kind: input, shape index: {}]
  %s3 = inlined_call_operand.vmem [shape: f32[8,2], index: 3, kind: input, shape index: {}]
  %s4 = inlined_call_operand.vmem [shape: f32[2,8,256], index: 4, kind: output, shape index: {}]
  %s5 = sld [smem:[#allocation0]]
  $region26: #{_residual_forward_impl.1} parent=0
    _
  %s7 = ssub.s32 1, %s5
  %s8 = scalar_select 0, %s7, %s5
  // Predicated region
  $region2: #{_residual_forward_impl.1} parent=0 // pred_check
    _
  $region3: #{_residual_forward_impl.1} parent=0 // pred_check_branch
    %10 = sbr.rel (0) target = $region5
  $region4: #{_residual_forward_impl.1} parent=0 // pred_region
    _
  $region5: #{_residual_forward_impl.1} parent=0 // pred_fallthru
    _
  // Predicated region
  $region6: #{_residual_forward_impl.1} parent=0 // pred_check
    _
  $region7: #{_residual_forward_impl.1} parent=0 // pred_check_branch
    %12 = sbr.rel (0) target = $region9
  $region8: #{_residual_forward_impl.1} parent=0 // pred_region
    _
  $region9: #{_residual_forward_impl.1} parent=0 // pred_fallthru
    _
  // Predicated region
  $region10: #{_residual_forward_impl.1} parent=0 // pred_check
    _
  $region11: #{_residual_forward_impl.1} parent=0 // pred_check_branch
    %14 = sbr.rel (0) target = $region13
  $region12: #{_residual_forward_impl.1} parent=0 // pred_region
    _
  $region13: #{_residual_forward_impl.1} parent=0 // pred_fallthru
    _
  // Predicated region
  $region14: #{_residual_forward_impl.1} parent=0 // pred_check
    _
  $region15: #{_residual_forward_impl.1} parent=0 // pred_check_branch
    %16 = sbr.rel (0) target = $region17
  $region16: #{_residual_forward_impl.1} parent=0 // pred_region
    _
  $region17: #{_residual_forward_impl.1} parent=0 // pred_fallthru
    _
  %v18 = vlaneseq
  %v19 = vand.u32 %v18, 127
  %v20 = vadd.s32 %v19, 128
  %v21 = vadd.s32 %v19, 256
  %v22 = vadd.s32 %v19, 15
  %v23 = vadd.s32 %v20, 15
  %v24 = vadd.s32 %v21, 15
  %vm25 = vcmp.lt.s32.totalorder %v22, 0
  %v26 = vsub.s32 0, %v22
  %v27 = vsel %vm25, %v26, %v22
  %v28 = vshrl.u32 %v27, 4
  %v29 = vand.u32 %v27, 15
  %v30 = vsub.s32 0, %v29
  %v31 = vsel %vm25, %v30, %v29
  %vm32 = vcmp.lt.s32.totalorder %v23, 0
  %v33 = vsub.s32 0, %v23
  %v34 = vsel %vm32, %v33, %v23
  %v35 = vshrl.u32 %v34, 4
  %v36 = vand.u32 %v34, 15
  %v37 = vsub.s32 0, %v36
  %v38 = vsel %vm32, %v37, %v36
  %vm39 = vcmp.lt.s32.totalorder %v24, 0
  %v40 = vsub.s32 0, %v24
  %v41 = vsel %vm39, %v40, %v24
  %v42 = vshrl.u32 %v41, 4
  %v43 = vand.u32 %v41, 15
  %v44 = vsub.s32 0, %v43
  %v45 = vsel %vm39, %v44, %v43
  %vm46 = vcmp.ne.s32.totalorder %v31, 0
  %vm47 = vcmp.ne.s32.totalorder %v38, 0
  %vm48 = vcmp.ne.s32.totalorder %v45, 0
  %vm49 = vcmp.lt.s32.totalorder %v31, 0
  %vm50 = vcmp.lt.s32.totalorder %v38, 0
  %vm51 = vcmp.lt.s32.totalorder %v45, 0
  %vm52 = vmand %vm49, %vm46
  %vm53 = vmand %vm50, %vm47
  %vm54 = vmand %vm51, %vm48
  %v55 = vadd.s32 %v31, 16
  %v56 = vadd.s32 %v38, 16
  %v57 = vadd.s32 %v45, 16
  %v58 = vsel %vm52, %v55, %v31
  %v59 = vsel %vm53, %v56, %v38
  %v60 = vsel %vm54, %v57, %v45
  %vm61 = vcmp.ne.s32.totalorder %v58, 15
  %vm62 = vcmp.ne.s32.totalorder %v59, 15
  %vm63 = vcmp.ne.s32.totalorder %v60, 15
  %vm64 = vcmp.ne.s32.totalorder %v58, 0
  %vm65 = vcmp.ne.s32.totalorder %v59, 0
  %vm66 = vcmp.ne.s32.totalorder %v60, 0
  %v67 = vld [vmem:[%s3] sm:$0xff]
  %v68 = vld [vmem:[%s0] sm:$0xff]
  %v70 = vcombine.high %v68, %v68
  %vm72 = vcmask 1043456
  %v73 = vsel %vm72, %v68, 0.0
  %v74 = vsel %vm72, %v70, 0.0
  %s75 = scalar_lea.vmem %s0, 8
  %v76 = vld [vmem:[%s75] sm:$0xff]
  %v78 = vcombine.high %v76, %v76
  %v80 = vsel %vm72, %v76, 0.0
  %v81 = vsel %vm72, %v78, 0.0
  %84 = vrot.lane.b32.xlu0 %v73, 17
  %v85 = vpop.permute.xlu0 %84
  %86 = vrot.lane.b32.xlu0 %v74, 17
  %v87 = vpop.permute.xlu0 %86
  %vm88 = vcmask 138240
  %v89 = vsel %vm88, %v85, %v87
  %v93 = vsel %vm88, 0.0, %v85
  %v94 = vsel %vm88, %v87, 0.0
  %v95 = vsel %vm61, 1, 0
  %v96 = vsel %vm62, 1, 0
  %v97 = vsel %vm63, 1, 0
  %vm98 = vcmp.eq.s32.totalorder %v95, 1
  %vm99 = vcmp.eq.s32.totalorder %v96, 1
  %vm100 = vcmp.eq.s32.totalorder %v97, 1
  %v101 = vsel %vm98, %v93, 0.0
  %v102 = vsel %vm99, %v89, 0.0
  %v103 = vsel %vm100, %v94, 0.0
  %v104 = vsel %vm64, 1, 0
  %v105 = vsel %vm65, 1, 0
  %v106 = vsel %vm66, 1, 0
  %vm107 = vcmp.eq.s32.totalorder %v104, 1
  %vm108 = vcmp.eq.s32.totalorder %v105, 1
  %vm109 = vcmp.eq.s32.totalorder %v106, 1
  %v110 = vsel %vm107, %v93, 0.0
  %v111 = vsel %vm108, %v89, 0.0
  %v112 = vsel %vm109, %v94, 0.0
  %115 = vrot.lane.b32.xlu0 %v80, 17
  %v116 = vpop.permute.xlu0 %115
  %117 = vrot.lane.b32.xlu0 %v81, 17
  %v118 = vpop.permute.xlu0 %117
  %v119 = vsel %vm88, %v116, %v118
  %v123 = vsel %vm88, 0.0, %v116
  %v124 = vsel %vm88, %v118, 0.0
  %v125 = vsel %vm98, %v123, 0.0
  %v126 = vsel %vm99, %v119, 0.0
  %v127 = vsel %vm100, %v124, 0.0
  %v128 = vsel %vm107, %v123, 0.0
  %v129 = vsel %vm108, %v119, 0.0
  %v130 = vsel %vm109, %v124, 0.0
  %133 = vrot.lane.b32.xlu0 %v93, 127
  %v134 = vpop.permute.xlu0 %133
  %135 = vrot.lane.b32.xlu0 %v89, 127
  %v136 = vpop.permute.xlu0 %135
  %137 = vrot.lane.b32.xlu0 %v94, 127
  %v138 = vpop.permute.xlu0 %137
  %vm139 = vcmask 1039360
  %v140 = vsel %vm139, %v134, %v136
  %v141 = vsel %vm139, %v136, %v138
  %146 = vrot.lane.b32.xlu0 %v123, 127
  %v147 = vpop.permute.xlu0 %146
  %148 = vrot.lane.b32.xlu0 %v119, 127
  %v149 = vpop.permute.xlu0 %148
  %150 = vrot.lane.b32.xlu0 %v124, 127
  %v151 = vpop.permute.xlu0 %150
  %v152 = vsel %vm139, %v147, %v149
  %v153 = vsel %vm139, %v149, %v151
  %159 = vrot.lane.b32.xlu0 %v110, 126
  %v160 = vpop.permute.xlu0 %159
  %161 = vrot.lane.b32.xlu0 %v111, 126
  %v162 = vpop.permute.xlu0 %161
  %163 = vrot.lane.b32.xlu0 %v112, 126
  %v164 = vpop.permute.xlu0 %163
  %vm165 = vcmask 1031168
  %v166 = vsel %vm165, %v160, %v162
  %v167 = vsel %vm165, %v162, %v164
  %173 = vrot.lane.b32.xlu0 %v128, 126
  %v174 = vpop.permute.xlu0 %173
  %175 = vrot.lane.b32.xlu0 %v129, 126
  %v176 = vpop.permute.xlu0 %175
  %177 = vrot.lane.b32.xlu0 %v130, 126
  %v178 = vpop.permute.xlu0 %177
  %v179 = vsel %vm165, %v174, %v176
  %v180 = vsel %vm165, %v176, %v178
  %186 = vrot.lane.b32.xlu0 %v101, 112
  %v187 = vpop.permute.xlu0 %186
  %188 = vrot.lane.b32.xlu0 %v102, 112
  %v189 = vpop.permute.xlu0 %188
  %190 = vrot.lane.b32.xlu0 %v103, 112
  %v191 = vpop.permute.xlu0 %190
  %vm192 = vcmask 916480
  %v193 = vsel %vm192, %v187, %v189
  %v194 = vsel %vm192, %v189, %v191
  %200 = vrot.lane.b32.xlu0 %v125, 112
  %v201 = vpop.permute.xlu0 %200
  %202 = vrot.lane.b32.xlu0 %v126, 112
  %v203 = vpop.permute.xlu0 %202
  %204 = vrot.lane.b32.xlu0 %v127, 112
  %v205 = vpop.permute.xlu0 %204
  %v206 = vsel %vm192, %v201, %v203
  %v207 = vsel %vm192, %v203, %v205
  %210 = vrot.lane.b32.xlu0 %v93, 111
  %v211 = vpop.permute.xlu0 %210
  %212 = vrot.lane.b32.xlu0 %v89, 111
  %v213 = vpop.permute.xlu0 %212
  %214 = vrot.lane.b32.xlu0 %v94, 111
  %v215 = vpop.permute.xlu0 %214
  %vm216 = vcmask 908288
  %v217 = vsel %vm216, %v211, %v213
  %v218 = vsel %vm216, %v213, %v215
  %221 = vrot.lane.b32.xlu0 %v123, 111
  %v222 = vpop.permute.xlu0 %221
  %223 = vrot.lane.b32.xlu0 %v119, 111
  %v224 = vpop.permute.xlu0 %223
  %225 = vrot.lane.b32.xlu0 %v124, 111
  %v226 = vpop.permute.xlu0 %225
  %v227 = vsel %vm216, %v222, %v224
  %v228 = vsel %vm216, %v224, %v226
  %231 = vrot.lane.b32.xlu0 %v110, 110
  %v232 = vpop.permute.xlu0 %231
  %233 = vrot.lane.b32.xlu0 %v111, 110
  %v234 = vpop.permute.xlu0 %233
  %235 = vrot.lane.b32.xlu0 %v112, 110
  %v236 = vpop.permute.xlu0 %235
  %vm237 = vcmask 900096
  %v238 = vsel %vm237, %v232, %v234
  %v239 = vsel %vm237, %v234, %v236
  %242 = vrot.lane.b32.xlu0 %v128, 110
  %v243 = vpop.permute.xlu0 %242
  %244 = vrot.lane.b32.xlu0 %v129, 110
  %v245 = vpop.permute.xlu0 %244
  %246 = vrot.lane.b32.xlu0 %v130, 110
  %v247 = vpop.permute.xlu0 %246
  %v248 = vsel %vm237, %v243, %v245
  %v249 = vsel %vm237, %v245, %v247
  %252 = vrot.lane.b32.xlu0 %v101, 96
  %v253 = vpop.permute.xlu0 %252
  %254 = vrot.lane.b32.xlu0 %v102, 96
  %v255 = vpop.permute.xlu0 %254
  %256 = vrot.lane.b32.xlu0 %v103, 96
  %v257 = vpop.permute.xlu0 %256
  %vm258 = vcmask 785408
  %v259 = vsel %vm258, %v253, %v255
  %v260 = vsel %vm258, %v255, %v257
  %263 = vrot.lane.b32.xlu0 %v125, 96
  %v264 = vpop.permute.xlu0 %263
  %265 = vrot.lane.b32.xlu0 %v126, 96
  %v266 = vpop.permute.xlu0 %265
  %267 = vrot.lane.b32.xlu0 %v127, 96
  %v268 = vpop.permute.xlu0 %267
  %v269 = vsel %vm258, %v264, %v266
  %v270 = vsel %vm258, %v266, %v268
  %273 = vrot.lane.b32.xlu0 %v93, 95
  %v274 = vpop.permute.xlu0 %273
  %275 = vrot.lane.b32.xlu0 %v89, 95
  %v276 = vpop.permute.xlu0 %275
  %277 = vrot.lane.b32.xlu0 %v94, 95
  %v278 = vpop.permute.xlu0 %277
  %vm279 = vcmask 777216
  %v280 = vsel %vm279, %v274, %v276
  %v281 = vsel %vm279, %v276, %v278
  %284 = vrot.lane.b32.xlu0 %v123, 95
  %v285 = vpop.permute.xlu0 %284
  %286 = vrot.lane.b32.xlu0 %v119, 95
  %v287 = vpop.permute.xlu0 %286
  %288 = vrot.lane.b32.xlu0 %v124, 95
  %v289 = vpop.permute.xlu0 %288
  %v290 = vsel %vm279, %v285, %v287
  %v291 = vsel %vm279, %v287, %v289
  %294 = vrot.lane.b32.xlu0 %v110, 94
  %v295 = vpop.permute.xlu0 %294
  %296 = vrot.lane.b32.xlu0 %v111, 94
  %v297 = vpop.permute.xlu0 %296
  %298 = vrot.lane.b32.xlu0 %v112, 94
  %v299 = vpop.permute.xlu0 %298
  %vm300 = vcmask 769024
  %v301 = vsel %vm300, %v295, %v297
  %v302 = vsel %vm300, %v297, %v299
  %305 = vrot.lane.b32.xlu0 %v128, 94
  %v306 = vpop.permute.xlu0 %305
  %307 = vrot.lane.b32.xlu0 %v129, 94
  %v308 = vpop.permute.xlu0 %307
  %309 = vrot.lane.b32.xlu0 %v130, 94
  %v310 = vpop.permute.xlu0 %309
  %v311 = vsel %vm300, %v306, %v308
  %v312 = vsel %vm300, %v308, %v310
  %v315 = vpack.c.bf16 %v140, %v101
  %v316 = vpack.c.bf16 %v141, %v102
  %v317 = vpack.c.bf16 %v152, %v125
  %v318 = vpack.c.bf16 %v153, %v126
  %v319 = vpack.c.bf16 %v193, %v166
  %v320 = vpack.c.bf16 %v194, %v167
  %v321 = vpack.c.bf16 %v206, %v179
  %v322 = vpack.c.bf16 %v207, %v180
  %v323 = vpack.c.bf16 %v238, %v217
  %v324 = vpack.c.bf16 %v239, %v218
  %v325 = vpack.c.bf16 %v248, %v227
  %v326 = vpack.c.bf16 %v249, %v228
  %v327 = vpack.c.bf16 %v280, %v259
  %v328 = vpack.c.bf16 %v281, %v260
  %v329 = vpack.c.bf16 %v290, %v269
  %v330 = vpack.c.bf16 %v291, %v270
  %v331 = vpack.c.bf16 %v301, %v301
  %v332 = vpack.c.bf16 %v302, %v302
  %v333 = vpack.c.bf16 %v311, %v311
  %v334 = vpack.c.bf16 %v312, %v312
  %v335 = vld [vmem:[%s1] sm:$0xf]
  %337 = vset.pattern.permute.xlu0 0
  %338 = vperm.xlu0 %337, %v67
  %v339 = vpop.permute.xlu0 %338
  %vm341 = vcmask 588800
  %v343 = vsel %vm341, %v335, 0
  %v346 = vsel %vm72, %v331, 0
  %v349 = vsel %vm72, %v332, 0
  %v352 = vsel %vm72, %v333, 0
  %v355 = vsel %vm72, %v334, 0
  %357 = vmatprep.subr.bf16.mxu0 0
  %358 = vmatpush1.bf16.msra.mxu0 0
  %359 = vmatprep.subr.bf16.mxu0 0
  %360 = vmatpush1.bf16.msra.mxu0 0
  %361 = vmatprep.subr.bf16.mxu0 0
  %362 = vmatpush1.bf16.msra.mxu0 0
  %363 = vmatprep.subr.bf16.mxu0 %v349
  %364 = vmatpush1.bf16.msra.mxu0 %v346
  %365 = vmatprep.subr.bf16.mxu0 %v328
  %366 = vmatpush1.bf16.msra.mxu0 %v327
  %367 = vmatprep.subr.bf16.mxu0 %v324
  %368 = vmatpush1.bf16.msra.mxu0 %v323
  %369 = vmatprep.subr.bf16.mxu0 %v320
  %370 = vmatpush1.bf16.msra.mxu0 %v319
  %371 = vmatprep.subr.bf16.mxu0 %v316
  %372 = vmatpush1.bf16.msra.mxu0 %v315
  %373 = vmatprep.subr.bf16.mxu0 0
  %374 = vmatpush2.bf16.msra.mxu0 0
  %375 = vmatprep.subr.bf16.mxu0 0
  %376 = vmatpush2.bf16.msra.mxu0 0
  %377 = vmatprep.subr.bf16.mxu0 0
  %378 = vmatpush2.bf16.msra.mxu0 0
  %379 = vmatprep.subr.bf16.mxu0 0
  %380 = vmatpush2.bf16.msra.mxu0 0
  %381 = vmatprep.subr.bf16.mxu0 0
  %382 = vmatpush2.bf16.msra.mxu0 0
  %383 = vmatprep.subr.bf16.mxu0 0
  %384 = vmatpush2.bf16.msra.mxu0 0
  %385 = vmatprep.subr.bf16.mxu0 0
  %386 = vmatpush2.bf16.msra.mxu0 0
  %387 = vmatprep.subr.bf16.mxu0 0
  %388 = vmatpush2.bf16.msra.mxu0 0
  %389 = vmatprep.mubr.bf16.mxu0 0
  %390 = vmatmul.mubr.bf16.gmra.mxu0 %v343
  %v391 = vpop.f32.mrf.mxu0
  %v392 = vadd.f32 %v339, %v391
  %v393 = vpop.f32.mrf.mxu0
  %v394 = vadd.f32 %v339, %v393
  %v395 = vpop.f32.mrf.mxu0
  %v396 = vpop.f32.mrf.mxu0
  %397 = vdwg.mxu0
  %398 = vmatprep.subr.bf16.mxu0 0
  %399 = vmatpush1.bf16.msra.mxu0 0
  %400 = vmatprep.subr.bf16.mxu0 0
  %401 = vmatpush1.bf16.msra.mxu0 0
  %402 = vmatprep.subr.bf16.mxu0 0
  %403 = vmatpush1.bf16.msra.mxu0 0
  %404 = vmatprep.subr.bf16.mxu0 %v355
  %405 = vmatpush1.bf16.msra.mxu0 %v352
  %406 = vmatprep.subr.bf16.mxu0 %v330
  %407 = vmatpush1.bf16.msra.mxu0 %v329
  %408 = vmatprep.subr.bf16.mxu0 %v326
  %409 = vmatpush1.bf16.msra.mxu0 %v325
  %410 = vmatprep.subr.bf16.mxu0 %v322
  %411 = vmatpush1.bf16.msra.mxu0 %v321
  %412 = vmatprep.subr.bf16.mxu0 %v318
  %413 = vmatpush1.bf16.msra.mxu0 %v317
  %414 = vmatprep.subr.bf16.mxu0 0
  %415 = vmatpush2.bf16.msra.mxu0 0
  %416 = vmatprep.subr.bf16.mxu0 0
  %417 = vmatpush2.bf16.msra.mxu0 0
  %418 = vmatprep.subr.bf16.mxu0 0
  %419 = vmatpush2.bf16.msra.mxu0 0
  %420 = vmatprep.subr.bf16.mxu0 0
  %421 = vmatpush2.bf16.msra.mxu0 0
  %422 = vmatprep.subr.bf16.mxu0 0
  %423 = vmatpush2.bf16.msra.mxu0 0
  %424 = vmatprep.subr.bf16.mxu0 0
  %425 = vmatpush2.bf16.msra.mxu0 0
  %426 = vmatprep.subr.bf16.mxu0 0
  %427 = vmatpush2.bf16.msra.mxu0 0
  %428 = vmatprep.subr.bf16.mxu0 0
  %429 = vmatpush2.bf16.msra.mxu0 0
  %430 = vmatprep.mubr.bf16.mxu0 0
  %431 = vmatmul.mubr.bf16.gmra.mxu0 %v343
  %v432 = vpop.f32.mrf.mxu0
  %v433 = vadd.f32 %v339, %v432
  %v434 = vpop.f32.mrf.mxu0
  %v435 = vadd.f32 %v339, %v434
  %v436 = vpop.f32.mrf.mxu0
  %v437 = vpop.f32.mrf.mxu0
  %438 = vdwg.mxu0
  %vm439 = vcmp.ge.f32.partialorder %v392, 0.0
  %vm440 = vcmp.ge.f32.partialorder %v394, 0.0
  %vm441 = vcmp.ge.f32.partialorder %v433, 0.0
  %vm442 = vcmp.ge.f32.partialorder %v435, 0.0
  %v443 = vmul.f32 %v392, 0.1
  %v444 = vmul.f32 %v394, 0.1
  %v445 = vmul.f32 %v433, 0.1
  %v446 = vmul.f32 %v435, 0.1
  %v447 = vsel %vm439, %v392, %v443
  %v448 = vsel %vm440, %v394, %v444
  %v449 = vsel %vm441, %v433, %v445
  %v450 = vsel %vm442, %v435, %v446
  %453 = vrot.lane.b32.xlu0 %v447, 17
  %v454 = vpop.permute.xlu0 %453
  %455 = vrot.lane.b32.xlu0 %v448, 17
  %v456 = vpop.permute.xlu0 %455
  %v457 = vsel %vm88, %v454, %v456
  %v461 = vsel %vm88, 0.0, %v454
  %v462 = vsel %vm88, %v456, 0.0
  %v463 = vsel %vm98, %v461, 0.0
  %v464 = vsel %vm99, %v457, 0.0
  %v465 = vsel %vm100, %v462, 0.0
  %v466 = vsel %vm107, %v461, 0.0
  %v467 = vsel %vm108, %v457, 0.0
  %v468 = vsel %vm109, %v462, 0.0
  %471 = vrot.lane.b32.xlu0 %v449, 17
  %v472 = vpop.permute.xlu0 %471
  %473 = vrot.lane.b32.xlu0 %v450, 17
  %v474 = vpop.permute.xlu0 %473
  %v475 = vsel %vm88, %v472, %v474
  %v479 = vsel %vm88, 0.0, %v472
  %v480 = vsel %vm88, %v474, 0.0
  %v481 = vsel %vm98, %v479, 0.0
  %v482 = vsel %vm99, %v475, 0.0
  %v483 = vsel %vm100, %v480, 0.0
  %v484 = vsel %vm107, %v479, 0.0
  %v485 = vsel %vm108, %v475, 0.0
  %v486 = vsel %vm109, %v480, 0.0
  %489 = vrot.lane.b32.xlu0 %v461, 127
  %v490 = vpop.permute.xlu0 %489
  %491 = vrot.lane.b32.xlu0 %v457, 127
  %v492 = vpop.permute.xlu0 %491
  %493 = vrot.lane.b32.xlu0 %v462, 127
  %v494 = vpop.permute.xlu0 %493
  %v495 = vsel %vm139, %v490, %v492
  %v496 = vsel %vm139, %v492, %v494
  %501 = vrot.lane.b32.xlu0 %v479, 127
  %v502 = vpop.permute.xlu0 %501
  %503 = vrot.lane.b32.xlu0 %v475, 127
  %v504 = vpop.permute.xlu0 %503
  %505 = vrot.lane.b32.xlu0 %v480, 127
  %v506 = vpop.permute.xlu0 %505
  %v507 = vsel %vm139, %v502, %v504
  %v508 = vsel %vm139, %v504, %v506
  %514 = vrot.lane.b32.xlu0 %v466, 126
  %v515 = vpop.permute.xlu0 %514
  %516 = vrot.lane.b32.xlu0 %v467, 126
  %v517 = vpop.permute.xlu0 %516
  %518 = vrot.lane.b32.xlu0 %v468, 126
  %v519 = vpop.permute.xlu0 %518
  %v520 = vsel %vm165, %v515, %v517
  %v521 = vsel %vm165, %v517, %v519
  %527 = vrot.lane.b32.xlu0 %v484, 126
  %v528 = vpop.permute.xlu0 %527
  %529 = vrot.lane.b32.xlu0 %v485, 126
  %v530 = vpop.permute.xlu0 %529
  %531 = vrot.lane.b32.xlu0 %v486, 126
  %v532 = vpop.permute.xlu0 %531
  %v533 = vsel %vm165, %v528, %v530
  %v534 = vsel %vm165, %v530, %v532
  %540 = vrot.lane.b32.xlu0 %v463, 112
  %v541 = vpop.permute.xlu0 %540
  %542 = vrot.lane.b32.xlu0 %v464, 112
  %v543 = vpop.permute.xlu0 %542
  %544 = vrot.lane.b32.xlu0 %v465, 112
  %v545 = vpop.permute.xlu0 %544
  %v546 = vsel %vm192, %v541, %v543
  %v547 = vsel %vm192, %v543, %v545
  %553 = vrot.lane.b32.xlu0 %v481, 112
  %v554 = vpop.permute.xlu0 %553
  %555 = vrot.lane.b32.xlu0 %v482, 112
  %v556 = vpop.permute.xlu0 %555
  %557 = vrot.lane.b32.xlu0 %v483, 112
  %v558 = vpop.permute.xlu0 %557
  %v559 = vsel %vm192, %v554, %v556
  %v560 = vsel %vm192, %v556, %v558
  %563 = vrot.lane.b32.xlu0 %v461, 111
  %v564 = vpop.permute.xlu0 %563
  %565 = vrot.lane.b32.xlu0 %v457, 111
  %v566 = vpop.permute.xlu0 %565
  %567 = vrot.lane.b32.xlu0 %v462, 111
  %v568 = vpop.permute.xlu0 %567
  %v569 = vsel %vm216, %v564, %v566
  %v570 = vsel %vm216, %v566, %v568
  %573 = vrot.lane.b32.xlu0 %v479, 111
  %v574 = vpop.permute.xlu0 %573
  %575 = vrot.lane.b32.xlu0 %v475, 111
  %v576 = vpop.permute.xlu0 %575
  %577 = vrot.lane.b32.xlu0 %v480, 111
  %v578 = vpop.permute.xlu0 %577
  %v579 = vsel %vm216, %v574, %v576
  %v580 = vsel %vm216, %v576, %v578
  %583 = vrot.lane.b32.xlu0 %v466, 110
  %v584 = vpop.permute.xlu0 %583
  %585 = vrot.lane.b32.xlu0 %v467, 110
  %v586 = vpop.permute.xlu0 %585
  %587 = vrot.lane.b32.xlu0 %v468, 110
  %v588 = vpop.permute.xlu0 %587
  %v589 = vsel %vm237, %v584, %v586
  %v590 = vsel %vm237, %v586, %v588
  %593 = vrot.lane.b32.xlu0 %v484, 110
  %v594 = vpop.permute.xlu0 %593
  %595 = vrot.lane.b32.xlu0 %v485, 110
  %v596 = vpop.permute.xlu0 %595
  %597 = vrot.lane.b32.xlu0 %v486, 110
  %v598 = vpop.permute.xlu0 %597
  %v599 = vsel %vm237, %v594, %v596
  %v600 = vsel %vm237, %v596, %v598
  %603 = vrot.lane.b32.xlu0 %v463, 96
  %v604 = vpop.permute.xlu0 %603
  %605 = vrot.lane.b32.xlu0 %v464, 96
  %v606 = vpop.permute.xlu0 %605
  %607 = vrot.lane.b32.xlu0 %v465, 96
  %v608 = vpop.permute.xlu0 %607
  %v609 = vsel %vm258, %v604, %v606
  %v610 = vsel %vm258, %v606, %v608
  %613 = vrot.lane.b32.xlu0 %v481, 96
  %v614 = vpop.permute.xlu0 %613
  %615 = vrot.lane.b32.xlu0 %v482, 96
  %v616 = vpop.permute.xlu0 %615
  %617 = vrot.lane.b32.xlu0 %v483, 96
  %v618 = vpop.permute.xlu0 %617
  %v619 = vsel %vm258, %v614, %v616
  %v620 = vsel %vm258, %v616, %v618
  %623 = vrot.lane.b32.xlu0 %v461, 95
  %v624 = vpop.permute.xlu0 %623
  %625 = vrot.lane.b32.xlu0 %v457, 95
  %v626 = vpop.permute.xlu0 %625
  %627 = vrot.lane.b32.xlu0 %v462, 95
  %v628 = vpop.permute.xlu0 %627
  %v629 = vsel %vm279, %v624, %v626
  %v630 = vsel %vm279, %v626, %v628
  %633 = vrot.lane.b32.xlu0 %v479, 95
  %v634 = vpop.permute.xlu0 %633
  %635 = vrot.lane.b32.xlu0 %v475, 95
  %v636 = vpop.permute.xlu0 %635
  %637 = vrot.lane.b32.xlu0 %v480, 95
  %v638 = vpop.permute.xlu0 %637
  %v639 = vsel %vm279, %v634, %v636
  %v640 = vsel %vm279, %v636, %v638
  %643 = vrot.lane.b32.xlu0 %v466, 94
  %v644 = vpop.permute.xlu0 %643
  %645 = vrot.lane.b32.xlu0 %v467, 94
  %v646 = vpop.permute.xlu0 %645
  %647 = vrot.lane.b32.xlu0 %v468, 94
  %v648 = vpop.permute.xlu0 %647
  %v649 = vsel %vm300, %v644, %v646
  %v650 = vsel %vm300, %v646, %v648
  %653 = vrot.lane.b32.xlu0 %v484, 94
  %v654 = vpop.permute.xlu0 %653
  %655 = vrot.lane.b32.xlu0 %v485, 94
  %v656 = vpop.permute.xlu0 %655
  %657 = vrot.lane.b32.xlu0 %v486, 94
  %v658 = vpop.permute.xlu0 %657
  %v659 = vsel %vm300, %v654, %v656
  %v660 = vsel %vm300, %v656, %v658
  %v663 = vpack.c.bf16 %v495, %v463
  %v664 = vpack.c.bf16 %v496, %v464
  %v665 = vpack.c.bf16 %v507, %v481
  %v666 = vpack.c.bf16 %v508, %v482
  %v667 = vpack.c.bf16 %v546, %v520
  %v668 = vpack.c.bf16 %v547, %v521
  %v669 = vpack.c.bf16 %v559, %v533
  %v670 = vpack.c.bf16 %v560, %v534
  %v671 = vpack.c.bf16 %v589, %v569
  %v672 = vpack.c.bf16 %v590, %v570
  %v673 = vpack.c.bf16 %v599, %v579
  %v674 = vpack.c.bf16 %v600, %v580
  %v675 = vpack.c.bf16 %v629, %v609
  %v676 = vpack.c.bf16 %v630, %v610
  %v677 = vpack.c.bf16 %v639, %v619
  %v678 = vpack.c.bf16 %v640, %v620
  %v679 = vpack.c.bf16 %v649, %v649
  %v680 = vpack.c.bf16 %v650, %v650
  %v681 = vpack.c.bf16 %v659, %v659
  %v682 = vpack.c.bf16 %v660, %v660
  %v683 = vld [vmem:[%s2] sm:$0xf]
  %684 = vset.pattern.permute.xlu0 1
  %685 = vperm.xlu0 %684, %v67
  %v686 = vpop.permute.xlu0 %685
  %v689 = vsel %vm341, %v683, 0
  %v692 = vsel %vm72, %v679, 0
  %v695 = vsel %vm72, %v680, 0
  %v698 = vsel %vm72, %v681, 0
  %v701 = vsel %vm72, %v682, 0
  %703 = vmatprep.subr.bf16.mxu0 0
  %704 = vmatpush1.bf16.msra.mxu0 0
  %705 = vmatprep.subr.bf16.mxu0 0
  %706 = vmatpush1.bf16.msra.mxu0 0
  %707 = vmatprep.subr.bf16.mxu0 0
  %708 = vmatpush1.bf16.msra.mxu0 0
  %709 = vmatprep.subr.bf16.mxu0 %v695
  %710 = vmatpush1.bf16.msra.mxu0 %v692
  %711 = vmatprep.subr.bf16.mxu0 %v676
  %712 = vmatpush1.bf16.msra.mxu0 %v675
  %713 = vmatprep.subr.bf16.mxu0 %v672
  %714 = vmatpush1.bf16.msra.mxu0 %v671
  %715 = vmatprep.subr.bf16.mxu0 %v668
  %716 = vmatpush1.bf16.msra.mxu0 %v667
  %717 = vmatprep.subr.bf16.mxu0 %v664
  %718 = vmatpush1.bf16.msra.mxu0 %v663
  %719 = vmatprep.subr.bf16.mxu0 0
  %720 = vmatpush2.bf16.msra.mxu0 0
  %721 = vmatprep.subr.bf16.mxu0 0
  %722 = vmatpush2.bf16.msra.mxu0 0
  %723 = vmatprep.subr.bf16.mxu0 0
  %724 = vmatpush2.bf16.msra.mxu0 0
  %725 = vmatprep.subr.bf16.mxu0 0
  %726 = vmatpush2.bf16.msra.mxu0 0
  %727 = vmatprep.subr.bf16.mxu0 0
  %728 = vmatpush2.bf16.msra.mxu0 0
  %729 = vmatprep.subr.bf16.mxu0 0
  %730 = vmatpush2.bf16.msra.mxu0 0
  %731 = vmatprep.subr.bf16.mxu0 0
  %732 = vmatpush2.bf16.msra.mxu0 0
  %733 = vmatprep.subr.bf16.mxu0 0
  %734 = vmatpush2.bf16.msra.mxu0 0
  %735 = vmatprep.mubr.bf16.mxu0 0
  %736 = vmatmul.mubr.bf16.gmra.mxu0 %v689
  %v737 = vpop.f32.mrf.mxu0
  %v738 = vadd.f32 %v686, %v737
  %v739 = vpop.f32.mrf.mxu0
  %v740 = vadd.f32 %v686, %v739
  %v741 = vpop.f32.mrf.mxu0
  %v742 = vpop.f32.mrf.mxu0
  %743 = vdwg.mxu0
  %744 = vmatprep.subr.bf16.mxu0 0
  %745 = vmatpush1.bf16.msra.mxu0 0
  %746 = vmatprep.subr.bf16.mxu0 0
  %747 = vmatpush1.bf16.msra.mxu0 0
  %748 = vmatprep.subr.bf16.mxu0 0
  %749 = vmatpush1.bf16.msra.mxu0 0
  %750 = vmatprep.subr.bf16.mxu0 %v701
  %751 = vmatpush1.bf16.msra.mxu0 %v698
  %752 = vmatprep.subr.bf16.mxu0 %v678
  %753 = vmatpush1.bf16.msra.mxu0 %v677
  %754 = vmatprep.subr.bf16.mxu0 %v674
  %755 = vmatpush1.bf16.msra.mxu0 %v673
  %756 = vmatprep.subr.bf16.mxu0 %v670
  %757 = vmatpush1.bf16.msra.mxu0 %v669
  %758 = vmatprep.subr.bf16.mxu0 %v666
  %759 = vmatpush1.bf16.msra.mxu0 %v665
  %760 = vmatprep.subr.bf16.mxu0 0
  %761 = vmatpush2.bf16.msra.mxu0 0
  %762 = vmatprep.subr.bf16.mxu0 0
  %763 = vmatpush2.bf16.msra.mxu0 0
  %764 = vmatprep.subr.bf16.mxu0 0
  %765 = vmatpush2.bf16.msra.mxu0 0
  %766 = vmatprep.subr.bf16.mxu0 0
  %767 = vmatpush2.bf16.msra.mxu0 0
  %768 = vmatprep.subr.bf16.mxu0 0
  %769 = vmatpush2.bf16.msra.mxu0 0
  %770 = vmatprep.subr.bf16.mxu0 0
  %771 = vmatpush2.bf16.msra.mxu0 0
  %772 = vmatprep.subr.bf16.mxu0 0
  %773 = vmatpush2.bf16.msra.mxu0 0
  %774 = vmatprep.subr.bf16.mxu0 0
  %775 = vmatpush2.bf16.msra.mxu0 0
  %776 = vmatprep.mubr.bf16.mxu0 0
  %777 = vmatmul.mubr.bf16.gmra.mxu0 %v689
  %v778 = vpop.f32.mrf.mxu0
  %v779 = vadd.f32 %v686, %v778
  %v780 = vpop.f32.mrf.mxu0
  %v781 = vadd.f32 %v686, %v780
  %v782 = vpop.f32.mrf.mxu0
  %v783 = vpop.f32.mrf.mxu0
  %784 = vdwg.mxu0
  %vm785 = vcmp.ge.f32.partialorder %v738, 0.0
  %vm786 = vcmp.ge.f32.partialorder %v740, 0.0
  %vm787 = vcmp.ge.f32.partialorder %v779, 0.0
  %vm788 = vcmp.ge.f32.partialorder %v781, 0.0
  %v789 = vmul.f32 %v738, 0.1
  %v790 = vmul.f32 %v740, 0.1
  %v791 = vmul.f32 %v779, 0.1
  %v792 = vmul.f32 %v781, 0.1
  %v793 = vsel %vm785, %v738, %v789
  %v794 = vsel %vm786, %v740, %v790
  %v795 = vsel %vm787, %v779, %v791
  %v796 = vsel %vm788, %v781, %v792
  %797 = vst [vmem:[%s4] sm:$0xff] %v793
  %798 = vst [vmem:[%s4 + $0x8] sm:$0xff] %v794
  %s799 = scalar_lea.vmem %s4, 16
  %800 = vst [vmem:[%s799] sm:$0xff] %v795
  %801 = vst [vmem:[%s799 + $0x8] sm:$0xff] %v796
  // Predicated region
  $region18: #{_residual_forward_impl.1} parent=0 // pred_check
    _
  $region19: #{_residual_forward_impl.1} parent=0 // pred_check_branch
    %803 = sbr.rel (0) target = $region21
  $region20: #{_residual_forward_impl.1} parent=0 // pred_region
    _
  $region21: #{_residual_forward_impl.1} parent=0 // pred_fallthru
    _
  // Predicated region
  $region22: #{_residual_forward_impl.1} parent=0 // pred_check
    _
  $region23: #{_residual_forward_impl.1} parent=0 // pred_check_branch
    %805 = sbr.rel (0) target = $region25
  $region24: #{_residual_forward_impl.1} parent=0 // pred_region
    _
  $region25: #{_residual_forward_impl.1} parent=0 // pred_fallthru
    _

</llo_original>
